<compile_context>
chip_gen: v5e
topology: v5e:2x2
jax: 0.10.0
libtpu: 0.0.40
codegen_flags: <defaults>
</compile_context>

<pallas_src>
import functools

import numpy as np
import jax
import jax.numpy as jnp
from jax import lax
from jax.experimental import pallas as pl
from jax.experimental.pallas import tpu as pltpu


def _round_up(v, m):
    return ((v + m - 1) // m) * m


# ---------------------------------------------------------------------------
# kernel
# ---------------------------------------------------------------------------
def _fused_kernel(x_ref, ae_ref, ao_ref, inv_ref, w2_ref, out_ref, *, bc_pad):
    """One packed super-segment (bin) per grid step.

    x_ref  : (BC_pad, N_pad)    cd   x for this bin, batch folded into sublanes
    ae_ref : (T_pad,  N_pad)    cd   block-diag adj[0::2, :] of the bin's segments
    ao_ref : (T_pad,  N_pad)    cd   block-diag adj[1::2, :]
    inv_ref: (1,      N_pad)    f32  1 / colsum(adj)  (zeros -> 1), precomputed
    w2_ref : (2*BC_pad, BC_pad) cd   [kron(I_B, W0.T); kron(I_B, W1.T)]
    out_ref: (BC_pad, N_pad)    out dtype
    """
    x = x_ref[...]
    ae = ae_ref[...]
    ao = ao_ref[...]
    cd = x.dtype

    # Adjacency contraction FIRST (the channel mix commutes with it); the
    # intermediates are tiny (BC_pad, T_pad) f32 tiles instead of the old
    # (2*BC_pad, N_pad) f32 slab.
    dn_bt = (((1,), (1,)), ((), ()))            # contract last dims: (BC,N)x(T,N)->(BC,T)
    ye = lax.dot_general(x, ae, dn_bt, preferred_element_type=jnp.float32)
    yo = lax.dot_general(x, ao, dn_bt, preferred_element_type=jnp.float32)

    # Channel mixing (the transposed stride-2 conv), both taps, on the tiny
    # (BC_pad, T_pad) intermediates: two small MXU matmuls, f32 accumulation.
    w0 = w2_ref[:bc_pad, :]
    w1 = w2_ref[bc_pad:, :]
    z = (jnp.dot(w0, ye.astype(cd), preferred_element_type=jnp.float32)
         + jnp.dot(w1, yo.astype(cd), preferred_element_type=jnp.float32))

    # @ adj[::2, :]   then the precomputed per-column normalization (no divides,
    # no in-kernel f32 upcast of the adjacency).
    out = jnp.dot(z.astype(cd), ae, preferred_element_type=jnp.float32)
    out_ref[...] = (out * inv_ref[...]).astype(out_ref.dtype)


# ---------------------------------------------------------------------------
# one-time (hoisted) adjacency preprocessing
# ---------------------------------------------------------------------------
def prepare_adjacency_conv(adjs, i, x_len, batch, channels, *,
                           compute_dtype=jnp.bfloat16, lane_bin=512):
    """Hoisted preprocessing: static across forward calls when the graph is fixed.

    Packs consecutive segments into block-diagonal super-segments (bins) so tiny
    segments share one grid step and nothing pads to the global max N, splits
    the adjacency into even/odd rows, and precomputes 1/colsum per column.
    """
    BC = batch * channels
    itemsize = jnp.dtype(compute_dtype).itemsize
    sub = 8 * (4 // itemsize)                  # sublane granularity: 8 f32 / 16 bf16
    bc_pad = _round_up(BC, sub)

    # ---- static segment metadata (input order -> bins are contiguous in L)
    segs = []
    start = 0
    for adj_group in adjs:
        adj = np.asarray(jax.device_get(adj_group[i]), dtype=np.float32)
        M, N = adj.shape
        assert start + N <= x_len
        if N > 0:
            if M > 0:
                assert M % 2 == 0, "stride-2 / kernel-2 conv needs even row count"
            segs.append((start, int(N), adj))
        start += N
    assert start == x_len
    if not segs:
        return dict(empty=True, batch=batch, channels=channels, x_len=x_len)

    # ---- greedy packing of consecutive segments into lane-dense bins
    n_cap = max(int(lane_bin), _round_up(max(N for _, N, _ in segs), 128))
    bins, cur, n_fill = [], [], 0
    for si, (_, N, _) in enumerate(segs):
        if cur and n_fill + N > n_cap:
            bins.append(cur)
            cur, n_fill = [], 0
        cur.append(si)
        n_fill += N
    if cur:
        bins.append(cur)

    bin_meta = []                              # (x_start, width) per bin
    for b in bins:
        s0 = segs[b[0]][0]
        width = sum(segs[si][1] for si in b)
        bin_meta.append((s0, width))

    n_pad = _round_up(max(w for _, w in bin_meta), 128)
    t_max = max(sum(segs[si][2].shape[0] // 2 for si in b) for b in bins)
    t_pad = _round_up(max(t_max, 1), sub)
    G = len(bins)

    aes = np.zeros((G, t_pad, n_pad), np.float32)
    aos = np.zeros((G, t_pad, n_pad), np.float32)
    inv = np.ones((G, 1, n_pad), np.float32)
    for g, b in enumerate(bins):
        n_off, t_off = 0, 0
        for si in b:
            _, N, adj = segs[si]
            M = adj.shape[0]
            if M > 0:
                T = M // 2
                aes[g, t_off:t_off + T, n_off:n_off + N] = adj[0::2, :]
                aos[g, t_off:t_off + T, n_off:n_off + N] = adj[1::2, :]
                colsum = adj.sum(axis=0)
                safe = np.where(colsum == 0.0, 1.0, colsum)
                inv[g, 0, n_off:n_off + N] = 1.0 / safe
                t_off += T
            n_off += N

    return dict(
        empty=False, batch=batch, channels=channels, x_len=x_len,
        compute_dtype=jnp.dtype(compute_dtype), bc_pad=bc_pad,
        n_pad=n_pad, t_pad=t_pad, bins=tuple(bin_meta),
        aes=jnp.asarray(aes).astype(compute_dtype),
        aos=jnp.asarray(aos).astype(compute_dtype),
        inv=jnp.asarray(inv),
    )


# ---------------------------------------------------------------------------
# per-call forward
# ---------------------------------------------------------------------------
def adjacency_conv_transpose(x, weight, prepared):
    """x: (B, C, L) f32, weight: (C, C, 2) = spatial_conv.weight, prepared from
    prepare_adjacency_conv. Returns (B, C, L) in x.dtype."""
    B, C, L = x.shape
    assert B == prepared["batch"] and C == prepared["channels"] and L == prepared["x_len"]
    if prepared["empty"]:
        return jnp.zeros((B, C, 0), x.dtype)

    cd = prepared["compute_dtype"]
    bc_pad = prepared["bc_pad"]
    n_pad = prepared["n_pad"]
    t_pad = prepared["t_pad"]
    bins = prepared["bins"]
    aes, aos, inv = prepared["aes"], prepared["aos"], prepared["inv"]
    G = len(bins)
    BC = B * C

    # x bins: batch folded into sublanes, lane-dense padding to n_pad.
    x_flat = x.reshape(BC, L)
    xs = jnp.stack([
        jnp.pad(lax.slice_in_dim(x_flat, s0, s0 + w, axis=1),
                ((0, bc_pad - BC), (0, n_pad - w)))
        for s0, w in bins
    ]).astype(cd)                                             # (G, BC_pad, N_pad)

    # Block-diagonal per-batch channel-mix weights, both conv taps stacked.
    # w0t[o, c] = W[c, o, 0]; kron(I_B, w0t) acts on the (B*C) folded sublanes.
    # TODO(synk): kron(I_B, W) is O(B^2) in size/FLOPs; for large B switch to a
    # reshape-based per-batch mix instead of the block-diagonal trick.
    w0t = weight[:, :, 0].T
    w1t = weight[:, :, 1].T
    eye_b = jnp.eye(B, dtype=weight.dtype)
    pad_w = ((0, bc_pad - BC), (0, bc_pad - BC))
    w2 = jnp.concatenate(
        [jnp.pad(jnp.kron(eye_b, w0t), pad_w),
         jnp.pad(jnp.kron(eye_b, w1t), pad_w)], axis=0).astype(cd)  # (2*BC_pad, BC_pad)

    # ---- explicit VMEM budget (double-buffered blocks + f32 temporaries),
    # kept v7x-safe (64 MiB physical / 32 MiB default scoped).
    cds = jnp.dtype(cd).itemsize
    blk = (bc_pad * n_pad * cds            # x
           + 2 * t_pad * n_pad * cds       # ae + ao
           + 8 * n_pad * 4                 # inv (sublane-padded)
           + bc_pad * n_pad * 4)           # out
    temps = (3 * bc_pad * t_pad + bc_pad * n_pad) * 4
    vmem_need = 2 * blk + 2 * (2 * bc_pad * bc_pad * cds) + temps
    vmem_limit = int(min(max(2 * vmem_need, 32 << 20), 48 << 20))
    vmem_limit = max(vmem_limit, vmem_need + (2 << 20))

    flops = 2 * G * (2 * bc_pad * n_pad * t_pad       # ye, yo
                     + 2 * bc_pad * bc_pad * t_pad    # channel mix (both taps)
                     + bc_pad * t_pad * n_pad)        # @ adj[::2, :]
    bytes_accessed = (int(xs.size + aes.size + aos.size) * cds
                      + int(inv.size) * 4 + int(w2.size) * cds
                      + G * bc_pad * n_pad * jnp.dtype(x.dtype).itemsize)

    kernel = functools.partial(_fused_kernel, bc_pad=bc_pad)
    out_stacked = pl.pallas_call(
        kernel,
        out_shape=jax.ShapeDtypeStruct((G, bc_pad, n_pad), x.dtype),
        grid_spec=pltpu.PrefetchScalarGridSpec(
            num_scalar_prefetch=0,
            grid=(G,),
            in_specs=[
                pl.BlockSpec((None, bc_pad, n_pad), lambda g: (g, 0, 0)),  # x bin
                pl.BlockSpec((None, t_pad, n_pad), lambda g: (g, 0, 0)),   # adj even rows
                pl.BlockSpec((None, t_pad, n_pad), lambda g: (g, 0, 0)),   # adj odd rows
                pl.BlockSpec((None, 1, n_pad), lambda g: (g, 0, 0)),       # 1/colsum
                pl.BlockSpec((2 * bc_pad, bc_pad), lambda g: (0, 0)),      # weights (resident)
            ],
            out_specs=pl.BlockSpec((None, bc_pad, n_pad), lambda g: (g, 0, 0)),
        ),
        compiler_params=pltpu.CompilerParams(
            dimension_semantics=("parallel",),      # bins independent -> megacore
            vmem_limit_bytes=vmem_limit),
        cost_estimate=pl.CostEstimate(
            flops=flops, transcendentals=0, bytes_accessed=bytes_accessed),
    )(xs, aes, aos, inv, w2)

    # Reassemble (B, C, L); bins cover contiguous, in-order L ranges.
    # TODO(synk): write bins in place (scalar-prefetched offsets + pl.Element
    # output indexing) to drop this extra XLA output pass.
    parts = [out_stacked[g, :BC, :w] for g, (_, w) in enumerate(bins)]
    flat = parts[0] if len(parts) == 1 else jnp.concatenate(parts, axis=1)
    return flat.reshape(B, C, L)


# ----------------------------- references ----------------------------------

def _conv_ref_pt(xd, adj, weight):
    """Pure-JAX f32 reference following the PyTorch op order exactly."""
    y = jnp.einsum('bcn,mn->bcm', xd, adj)            # x @ adj.T
    ye, yo = y[:, :, 0::2], y[:, :, 1::2]
    # F.conv1d(y, weight.transpose(0,1), stride=2):
    # out[b,o,t] = sum_{c,k} W[c,o,k] * y[b,c,2t+k]
    z = (jnp.einsum('co,bct->bot', weight[:, :, 0], ye)
         + jnp.einsum('co,bct->bot', weight[:, :, 1], yo))
    out = jnp.einsum('bot,tn->bon', z, adj[0::2, :])  # @ adj[::2, :]
    colsum = adj.sum(axis=0)
    colsum = jnp.where(colsum == 0, 1.0, colsum)
    return out / colsum


def _forward_ref_pt(x, i, adjs, weight):
    B, C, L = x.shape
    outs, start = [], 0
    for adj_group in adjs:
        adj = adj_group[i]
        M, N = adj.shape
        xd = x[:, :, start:start + N]
        outs.append(jnp.zeros((B, C, N), x.dtype) if M * N == 0
                    else _conv_ref_pt(xd, adj, weight))
        start += N
    return jnp.concatenate(outs, axis=2)


def _forward_ref_matched(x, i, adjs, weight, compute_dtype):
    """Reference mirroring the kernel's reordered factorization & dtype policy."""
    B, C, L = x.shape
    outs, start = [], 0
    for adj_group in adjs:
        adj = adj_group[i]
        M, N = adj.shape
        xd = x[:, :, start:start + N]
        if M * N == 0:
            outs.append(jnp.zeros((B, C, N), x.dtype))
        else:
            cd = compute_dtype
            xc = xd.astype(cd)
            ae = adj[0::2, :].astype(cd)
            ao = adj[1::2, :].astype(cd)
            ye = jnp.einsum('bcn,tn->bct', xc, ae,
                            preferred_element_type=jnp.float32).astype(cd)
            yo = jnp.einsum('bcn,tn->bct', xc, ao,
                            preferred_element_type=jnp.float32).astype(cd)
            w0 = weight[:, :, 0].astype(cd)
            w1 = weight[:, :, 1].astype(cd)
            z = (jnp.einsum('co,bct->bot', w0, ye,
                            preferred_element_type=jnp.float32)
                 + jnp.einsum('co,bct->bot', w1, yo,
                              preferred_element_type=jnp.float32)).astype(cd)
            out = jnp.einsum('bot,tn->bon', z, ae,
                             preferred_element_type=jnp.float32)
            colsum = adj.sum(axis=0)
            inv = 1.0 / jnp.where(colsum == 0, 1.0, colsum)
            outs.append((out * inv).astype(x.dtype))
        start += N
    return jnp.concatenate(outs, axis=2)


if __name__ == "__main__":
    key = jax.random.PRNGKey(0)
    kx, kw, ka0, ka1 = jax.random.split(key, 4)

    B, C = 2, 8
    # Segments: adjacencies of shape (M, N_seg); one empty adjacency exercises
    # the zeroing path. Total L = 16 + 8 + 6 = 30; all pack into ONE bin.
    adj0 = jax.random.bernoulli(ka0, 0.4, (8, 16)).astype(jnp.float32)
    adj1 = jax.random.bernoulli(ka1, 0.5, (4, 8)).astype(jnp.float32)
    adj2 = jnp.zeros((0, 6), jnp.float32)          # empty adjacency
    adjs = [[adj0], [adj1], [adj2]]                # adjs[g][i], i = 0
    i = 0
    L = 16 + 8 + 6

    x = jax.random.normal(kx, (B, C, L), jnp.float32)
    # spatial_conv = nn.Conv1d(C, C, kernel_size=2, stride=2) -> weight (C, C, 2)
    weight = 0.1 * jax.random.normal(kw, (C, C, 2), jnp.float32)

    ref_pt = _forward_ref_pt(x, i, adjs, weight)

    # f32 compute path: faithful check against the PyTorch-order reference.
    prep_f32 = prepare_adjacency_conv(adjs, i, L, B, C, compute_dtype=jnp.float32)
    out_f32 = jax.block_until_ready(adjacency_conv_transpose(x, weight, prep_f32))
    assert out_f32.shape == (B, C, L), out_f32.shape
    assert jnp.allclose(out_f32, ref_pt, atol=1e-3, rtol=1e-3), \
        float(jnp.max(jnp.abs(out_f32 - ref_pt)))

    # bf16 matmul path (v6e/v7x MXU-native): tight check vs a dtype-matched
    # reference, plus a loose sanity check vs the f32 reference.
    prep_bf16 = prepare_adjacency_conv(adjs, i, L, B, C, compute_dtype=jnp.bfloat16)
    out_bf16 = jax.block_until_ready(adjacency_conv_transpose(x, weight, prep_bf16))
    ref_m = _forward_ref_matched(x, i, adjs, weight, jnp.bfloat16)
    assert out_bf16.shape == (B, C, L), out_bf16.shape
    assert jnp.allclose(out_bf16, ref_m, atol=2e-3, rtol=2e-2), \
        float(jnp.max(jnp.abs(out_bf16 - ref_m)))
    assert jnp.allclose(out_bf16, ref_pt, atol=1e-1, rtol=1e-1), \
        float(jnp.max(jnp.abs(out_bf16 - ref_pt)))

    print("KERNEL_OK")
</pallas_src>

<mosaic_0001>
module attributes {stable_mosaic.version = 11 : i64} {
  func.func @_fused_kernel(%arg0: i32, %arg1: memref<1x16x128xf32, #tpu.memory_space<vmem>>, %arg2: memref<1x8x128xf32, #tpu.memory_space<vmem>>, %arg3: memref<1x8x128xf32, #tpu.memory_space<vmem>>, %arg4: memref<1x1x128xf32, #tpu.memory_space<vmem>>, %arg5: memref<32x16xf32, #tpu.memory_space<vmem>>, %arg6: memref<1x16x128xf32, #tpu.memory_space<vmem>>) attributes {dimension_semantics = [#tpu.dimension_semantics<parallel>], iteration_bounds = array<i64: 1>, scalar_prefetch = 0 : i64, scratch_operands = 0 : i64, tpu.core_type = #tpu.core_type<tc>, window_params = [{transform_indices = @transform_0, window_bounds = array<i64: 1, 16, 128>}, {transform_indices = @transform_1, window_bounds = array<i64: 1, 8, 128>}, {transform_indices = @transform_2, window_bounds = array<i64: 1, 8, 128>}, {transform_indices = @transform_3, window_bounds = array<i64: 1, 1, 128>}, {pipeline_mode = #tpu.pipeline_mode<synchronous>, transform_indices = @transform_4, window_bounds = array<i64: 32, 16>}, {transform_indices = @transform_5, window_bounds = array<i64: 1, 16, 128>}]} {
    %c0 = arith.constant 0 : index
    %c0_0 = arith.constant 0 : index
    %c0_1 = arith.constant 0 : index
    %0 = vector.load %arg1[%c0, %c0_0, %c0_1] : memref<1x16x128xf32, #tpu.memory_space<vmem>>, vector<1x16x128xf32>
    %1 = vector.shape_cast %0 : vector<1x16x128xf32> to vector<16x128xf32>
    %c0_2 = arith.constant 0 : index
    %c0_3 = arith.constant 0 : index
    %c0_4 = arith.constant 0 : index
    %2 = vector.load %arg2[%c0_2, %c0_3, %c0_4] : memref<1x8x128xf32, #tpu.memory_space<vmem>>, vector<1x8x128xf32>
    %3 = vector.shape_cast %2 : vector<1x8x128xf32> to vector<8x128xf32>
    %c0_5 = arith.constant 0 : index
    %c0_6 = arith.constant 0 : index
    %c0_7 = arith.constant 0 : index
    %4 = vector.load %arg3[%c0_5, %c0_6, %c0_7] : memref<1x8x128xf32, #tpu.memory_space<vmem>>, vector<1x8x128xf32>
    %5 = vector.shape_cast %4 : vector<1x8x128xf32> to vector<8x128xf32>
    %cst = arith.constant dense<0.000000e+00> : vector<16x8xf32>
    %6 = tpu.matmul %1, %3, %cst {dimension_numbers = #tpu.dot_dimension_numbers<[1], [1], [0], [0], [0, 0, 1, 0], [], []>} : vector<16x128xf32>, vector<8x128xf32>, vector<16x8xf32> -> vector<16x8xf32>
    %cst_8 = arith.constant dense<0.000000e+00> : vector<16x8xf32>
    %7 = tpu.matmul %1, %5, %cst_8 {dimension_numbers = #tpu.dot_dimension_numbers<[1], [1], [0], [0], [0, 0, 1, 0], [], []>} : vector<16x128xf32>, vector<8x128xf32>, vector<16x8xf32> -> vector<16x8xf32>
    %c0_9 = arith.constant 0 : index
    %c0_10 = arith.constant 0 : index
    %8 = vector.load %arg5[%c0_9, %c0_10] : memref<32x16xf32, #tpu.memory_space<vmem>>, vector<16x16xf32>
    %c16 = arith.constant 16 : index
    %c0_11 = arith.constant 0 : index
    %9 = vector.load %arg5[%c16, %c0_11] : memref<32x16xf32, #tpu.memory_space<vmem>>, vector<16x16xf32>
    %cst_12 = arith.constant dense<0.000000e+00> : vector<16x8xf32>
    %10 = tpu.matmul %8, %6, %cst_12 {dimension_numbers = #tpu.dot_dimension_numbers<[1], [0], [0], [1], [0, 0, 1, 1], [], []>} : vector<16x16xf32>, vector<16x8xf32>, vector<16x8xf32> -> vector<16x8xf32>
    %cst_13 = arith.constant dense<0.000000e+00> : vector<16x8xf32>
    %11 = tpu.matmul %9, %7, %cst_13 {dimension_numbers = #tpu.dot_dimension_numbers<[1], [0], [0], [1], [0, 0, 1, 1], [], []>} : vector<16x16xf32>, vector<16x8xf32>, vector<16x8xf32> -> vector<16x8xf32>
    %12 = arith.addf %10, %11 : vector<16x8xf32>
    %cst_14 = arith.constant dense<0.000000e+00> : vector<16x128xf32>
    %13 = tpu.matmul %12, %3, %cst_14 {dimension_numbers = #tpu.dot_dimension_numbers<[1], [0], [0], [1], [0, 0, 1, 1], [], []>} : vector<16x8xf32>, vector<8x128xf32>, vector<16x128xf32> -> vector<16x128xf32>
    %c0_15 = arith.constant 0 : index
    %c0_16 = arith.constant 0 : index
    %c0_17 = arith.constant 0 : index
    %14 = vector.load %arg4[%c0_15, %c0_16, %c0_17] : memref<1x1x128xf32, #tpu.memory_space<vmem>>, vector<1x1x128xf32>
    %15 = vector.shape_cast %14 : vector<1x1x128xf32> to vector<1x128xf32>
    %16 = vector.broadcast %15 : vector<1x128xf32> to vector<16x128xf32>
    %17 = arith.mulf %13, %16 : vector<16x128xf32>
    %c0_18 = arith.constant 0 : index
    %c0_19 = arith.constant 0 : index
    %c0_20 = arith.constant 0 : index
    %18 = vector.load %arg6[%c0_18, %c0_19, %c0_20] : memref<1x16x128xf32, #tpu.memory_space<vmem>>, vector<1x16x128xf32>
    %19 = vector.shape_cast %18 : vector<1x16x128xf32> to vector<16x128xf32>
    %20 = vector.shape_cast %17 : vector<16x128xf32> to vector<1x16x128xf32>
    tpu.vector_store %arg6[%c0_18, %c0_19, %c0_20], %20 {strides = array<i32>} : memref<1x16x128xf32, #tpu.memory_space<vmem>>, vector<1x16x128xf32>,
    return
  }
  func.func @transform_0(%arg0: i32) -> (i32, i32, i32) {
    %c0_i32 = arith.constant 0 : i32
    %c0_i32_0 = arith.constant 0 : i32
    %c0_i32_1 = arith.constant 0 : i32
    return %arg0, %c0_i32, %c0_i32_0 : i32, i32, i32
  }
  func.func @transform_1(%arg0: i32) -> (i32, i32, i32) {
    %c0_i32 = arith.constant 0 : i32
    %c0_i32_0 = arith.constant 0 : i32
    %c0_i32_1 = arith.constant 0 : i32
    return %arg0, %c0_i32, %c0_i32_0 : i32, i32, i32
  }
  func.func @transform_2(%arg0: i32) -> (i32, i32, i32) {
    %c0_i32 = arith.constant 0 : i32
    %c0_i32_0 = arith.constant 0 : i32
    %c0_i32_1 = arith.constant 0 : i32
    return %arg0, %c0_i32, %c0_i32_0 : i32, i32, i32
  }
  func.func @transform_3(%arg0: i32) -> (i32, i32, i32) {
    %c0_i32 = arith.constant 0 : i32
    %c0_i32_0 = arith.constant 0 : i32
    %c0_i32_1 = arith.constant 0 : i32
    return %arg0, %c0_i32, %c0_i32_0 : i32, i32, i32
  }
  func.func @transform_4(%arg0: i32) -> (i32, i32) {
    %c0_i32 = arith.constant 0 : i32
    %c0_i32_0 = arith.constant 0 : i32
    %c0_i32_1 = arith.constant 0 : i32
    return %c0_i32, %c0_i32_0 : i32, i32
  }
  func.func @transform_5(%arg0: i32) -> (i32, i32, i32) {
    %c0_i32 = arith.constant 0 : i32
    %c0_i32_0 = arith.constant 0 : i32
    %c0_i32_1 = arith.constant 0 : i32
    return %arg0, %c0_i32, %c0_i32_0 : i32, i32, i32
  }
}

</mosaic_0001>

<llo_original>
// kernel: tpu_custom_call.1
$region0: #{tpu_custom_call.1}
  #allocation0 [shape = 'u32[]', space=smem, size = 0x4, offset = 0x4, fixed_abs, tag = 'smem constant byte address 0x4 - core index']
  #allocation1 [shape = 'u32[72,128]{1,0:T(1,128)}', space=vmem, size = 0x9000, scoped, tag = 'internal scratch']
  %s0 = inlined_call_operand.vmem [shape: f32[1,16,128], index: 0, kind: input, shape index: {}]
  %s1 = inlined_call_operand.vmem [shape: f32[1,8,128], index: 1, kind: input, shape index: {}]
  %s2 = inlined_call_operand.vmem [shape: f32[1,8,128], index: 2, kind: input, shape index: {}]
  %s3 = inlined_call_operand.vmem [shape: f32[1,1,128], index: 3, kind: input, shape index: {}]
  %s4 = inlined_call_operand.vmem [shape: f32[32,16], index: 4, kind: input, shape index: {}]
  %s5 = inlined_call_operand.hbm [shape: f32[1,16,128], index: 5, kind: output, shape index: {}]
  %s6 = sld [smem:[#allocation0]]
  $region30: #{tpu_custom_call.1} parent=0
    _
  %s8 = ssub.s32 1, %s6
  %s9 = scalar_select 0, %s8, %s6
  $region1: #{tpu_custom_call.1} parent=0
    #allocation2 [shape = 'u8[8192]{0}', space=vmem, size = 0x2000, scoped, tag = 'output window, operand 0, single buffered']
    #allocation3 [shape = 's32[1]{0}', space=sflag, size = 0x4, scoped, tag = 'scoped memory for tpu_custom_call.1']
    %10 = vsyncpa [#allocation3], 0
    // Predicated region
    $region2: #{tpu_custom_call.1} parent=1 // pred_check
      _
    $region3: #{tpu_custom_call.1} parent=1 // pred_check_branch
      %12 = sbr.rel (0) target = $region5
    $region4: #{tpu_custom_call.1} parent=1 // pred_region
      _
    $region5: #{tpu_custom_call.1} parent=1 // pred_fallthru
      _
    // Predicated region
    $region6: #{tpu_custom_call.1} parent=1 // pred_check
      _
    $region7: #{tpu_custom_call.1} parent=1 // pred_check_branch
      %14 = sbr.rel (0) target = $region9
    $region8: #{tpu_custom_call.1} parent=1 // pred_region
      _
    $region9: #{tpu_custom_call.1} parent=1 // pred_fallthru
      _
    // Predicated region
    $region10: #{tpu_custom_call.1} parent=1 // pred_check
      _
    $region11: #{tpu_custom_call.1} parent=1 // pred_check_branch
      %16 = sbr.rel (0) target = $region13
    $region12: #{tpu_custom_call.1} parent=1 // pred_region
      _
    $region13: #{tpu_custom_call.1} parent=1 // pred_fallthru
      _
    // Predicated region
    $region14: #{tpu_custom_call.1} parent=1 // pred_check
      _
    $region15: #{tpu_custom_call.1} parent=1 // pred_check_branch
      %18 = sbr.rel (0) target = $region17
    $region16: #{tpu_custom_call.1} parent=1 // pred_region
      _
    $region17: #{tpu_custom_call.1} parent=1 // pred_fallthru
      _
    // Predicated region
    $region18: #{tpu_custom_call.1} parent=1 // pred_check
      _
    $region19: #{tpu_custom_call.1} parent=1 // pred_check_branch
      %20 = sbr.rel (0) target = $region21
    $region20: #{tpu_custom_call.1} parent=1 // pred_region
      _
    $region21: #{tpu_custom_call.1} parent=1 // pred_fallthru
      _
    %v21 = vld [vmem:[%s0] sm:$0xff]
    %v22 = vld [vmem:[%s0 + $0x8] sm:$0xff]
    %v23 = vld [vmem:[%s1] sm:$0xff]
    %v24 = vld [vmem:[%s2] sm:$0xff]
    %25 = vmatpush.xpose.msra.mxu0 0.0
    %26 = vmatpush.xpose.msra.mxu0 0.0
    %27 = vmatpush.xpose.msra.mxu0 0.0
    %28 = vmatpush.xpose.msra.mxu0 0.0
    %29 = vmatpush.xpose.msra.mxu0 0.0
    %30 = vmatpush.xpose.msra.mxu0 0.0
    %31 = vmatpush.xpose.msra.mxu0 0.0
    %32 = vmatpush.xpose.msra.mxu0 0.0
    %33 = vmatpush.xpose.msra.mxu0 0.0
    %34 = vmatpush.xpose.msra.mxu0 0.0
    %35 = vmatpush.xpose.msra.mxu0 0.0
    %36 = vmatpush.xpose.msra.mxu0 0.0
    %37 = vmatpush.xpose.msra.mxu0 0.0
    %38 = vmatpush.xpose.msra.mxu0 0.0
    %39 = vmatpush.xpose.msra.mxu0 0.0
    %40 = vmatpush.xpose.msra.mxu0 %v23
    %41 = vmatmul.f32.gmra.mxu0 %v21
    %v42 = vpop.f32.mrf.mxu0
    %v43 = vadd.f32 0.0, %v42
    %44 = vmatmul.f32.gmra.mxu0 %v22
    %v45 = vpop.f32.mrf.mxu0
    %v46 = vadd.f32 0.0, %v45
    %47 = vdwg.mxu0
    %48 = vmatpush.xpose.msra.mxu0 0.0
    %49 = vmatpush.xpose.msra.mxu0 0.0
    %50 = vmatpush.xpose.msra.mxu0 0.0
    %51 = vmatpush.xpose.msra.mxu0 0.0
    %52 = vmatpush.xpose.msra.mxu0 0.0
    %53 = vmatpush.xpose.msra.mxu0 0.0
    %54 = vmatpush.xpose.msra.mxu0 0.0
    %55 = vmatpush.xpose.msra.mxu0 0.0
    %56 = vmatpush.xpose.msra.mxu0 0.0
    %57 = vmatpush.xpose.msra.mxu0 0.0
    %58 = vmatpush.xpose.msra.mxu0 0.0
    %59 = vmatpush.xpose.msra.mxu0 0.0
    %60 = vmatpush.xpose.msra.mxu0 0.0
    %61 = vmatpush.xpose.msra.mxu0 0.0
    %62 = vmatpush.xpose.msra.mxu0 0.0
    %63 = vmatpush.xpose.msra.mxu0 %v24
    %64 = vmatmul.f32.gmra.mxu0 %v21
    %v65 = vpop.f32.mrf.mxu0
    %v66 = vadd.f32 0.0, %v65
    %67 = vmatmul.f32.gmra.mxu0 %v22
    %v68 = vpop.f32.mrf.mxu0
    %v69 = vadd.f32 0.0, %v68
    %70 = vdwg.mxu0
    %v71 = vld [vmem:[%s4] sm:$0xff]
    %v72 = vld [vmem:[%s4 + $0x8] sm:$0xff]
    %v73 = vld [vmem:[%s4 + $0x10] sm:$0xff]
    %v74 = vld [vmem:[%s4 + $0x18] sm:$0xff]
    %vm75 = vcmask 130048
    %v77 = vsel %vm75, %v73, 0
    %v80 = vsel %vm75, %v74, 0
    %82 = vmatpush.msra.mxu0 0.0
    %83 = vmatpush.msra.mxu0 0.0
    %84 = vmatpush.msra.mxu0 0.0
    %85 = vmatpush.msra.mxu0 0.0
    %86 = vmatpush.msra.mxu0 0.0
    %87 = vmatpush.msra.mxu0 0.0
    %88 = vmatpush.msra.mxu0 0.0
    %89 = vmatpush.msra.mxu0 0.0
    %90 = vmatpush.msra.mxu0 0.0
    %91 = vmatpush.msra.mxu0 0.0
    %92 = vmatpush.msra.mxu0 0.0
    %93 = vmatpush.msra.mxu0 0.0
    %94 = vmatpush.msra.mxu0 0.0
    %95 = vmatpush.msra.mxu0 0.0
    %96 = vmatpush.msra.mxu0 %v69
    %97 = vmatpush.msra.mxu0 %v66
    %98 = vmatmul.f32.gmra.mxu0 %v77
    %v99 = vpop.f32.mrf.mxu0
    %v100 = vadd.f32 0.0, %v99
    %101 = vmatmul.f32.gmra.mxu0 %v80
    %v102 = vpop.f32.mrf.mxu0
    %v103 = vadd.f32 0.0, %v102
    %104 = vdwg.mxu0
    %v106 = vsel %vm75, %v71, 0
    %v109 = vsel %vm75, %v72, 0
    %111 = vmatpush.msra.mxu0 0.0
    %112 = vmatpush.msra.mxu0 0.0
    %113 = vmatpush.msra.mxu0 0.0
    %114 = vmatpush.msra.mxu0 0.0
    %115 = vmatpush.msra.mxu0 0.0
    %116 = vmatpush.msra.mxu0 0.0
    %117 = vmatpush.msra.mxu0 0.0
    %118 = vmatpush.msra.mxu0 0.0
    %119 = vmatpush.msra.mxu0 0.0
    %120 = vmatpush.msra.mxu0 0.0
    %121 = vmatpush.msra.mxu0 0.0
    %122 = vmatpush.msra.mxu0 0.0
    %123 = vmatpush.msra.mxu0 0.0
    %124 = vmatpush.msra.mxu0 0.0
    %125 = vmatpush.msra.mxu0 %v46
    %126 = vmatpush.msra.mxu0 %v43
    %127 = vmatmul.f32.gmra.mxu0 %v106
    %v128 = vpop.f32.mrf.mxu0
    %v129 = vadd.f32 %v100, %v128
    %130 = vmatmul.f32.gmra.mxu0 %v109
    %v131 = vpop.f32.mrf.mxu0
    %v132 = vadd.f32 %v103, %v131
    %133 = vdwg.mxu0
    %vm134 = vcmask 64512
    %v136 = vsel %vm134, %v129, 0
    %v139 = vsel %vm134, %v132, 0
    %141 = vmatpush.msra.mxu0 0.0
    %142 = vmatpush.msra.mxu0 0.0
    %143 = vmatpush.msra.mxu0 0.0
    %144 = vmatpush.msra.mxu0 0.0
    %145 = vmatpush.msra.mxu0 0.0
    %146 = vmatpush.msra.mxu0 0.0
    %147 = vmatpush.msra.mxu0 0.0
    %148 = vmatpush.msra.mxu0 0.0
    %149 = vmatpush.msra.mxu0 0.0
    %150 = vmatpush.msra.mxu0 0.0
    %151 = vmatpush.msra.mxu0 0.0
    %152 = vmatpush.msra.mxu0 0.0
    %153 = vmatpush.msra.mxu0 0.0
    %154 = vmatpush.msra.mxu0 0.0
    %155 = vmatpush.msra.mxu0 0.0
    %156 = vmatpush.msra.mxu0 %v23
    %157 = vmatmul.f32.gmra.mxu0 %v136
    %v158 = vpop.f32.mrf.mxu0
    %v159 = vadd.f32 0.0, %v158
    %160 = vmatmul.f32.gmra.mxu0 %v139
    %v161 = vpop.f32.mrf.mxu0
    %v162 = vadd.f32 0.0, %v161
    %163 = vdwg.mxu0
    %v164 = vld [vmem:[%s3] sm:$0x1]
    %v166 = vperm.slane %v164, 0
    %v168 = vmul.f32 %v159, %v166
    %v169 = vmul.f32 %v162, %v166
    %170 = vst [vmem:[#allocation2] sm:$0xff] %v168
    %171 = vst [vmem:[#allocation2 + $0x8] sm:$0xff] %v169
    // Predicated region
    $region22: #{tpu_custom_call.1} parent=1 // pred_check
      _
    $region23: #{tpu_custom_call.1} parent=1 // pred_check_branch
      %173 = sbr.rel (0) target = $region25
    $region24: #{tpu_custom_call.1} parent=1 // pred_region
      %175 = vsyncadd [#allocation3], 0
      %s176 = sshll.u32 [#allocation2], 4
      %s177 = int_to_ptr.vmem [resolvable:$true] %s176
      %s178 = sshll.u32 %s5, 4
      %s179 = int_to_ptr.hbm [resolvable:$true] %s178
      %184 = dma.vmem_to_hbm [thread:$0]  %s177, 256, %s179, [#allocation3], 128, 128, 8
    $region25: #{tpu_custom_call.1} parent=1 // pred_fallthru
      _
    // Predicated region
    $region26: #{tpu_custom_call.1} parent=1 // pred_check
      _
    $region27: #{tpu_custom_call.1} parent=1 // pred_check_branch
      %186 = sbr.rel (0) target = $region29
    $region28: #{tpu_custom_call.1} parent=1 // pred_region
      %188 = dma.done [#allocation3], 256
    $region29: #{tpu_custom_call.1} parent=1 // pred_fallthru
      _
    %189 = vsyncpa [#allocation3], 1

</llo_original>
